<compile_context>
chip_gen: v7x
topology: tpu7x:2x2x1
jax: 0.10.0
libtpu: 0.0.40
codegen_flags: <defaults>
</compile_context>

<pallas_src>
import jax
import jax.numpy as jnp
from jax.experimental import pallas as pl
from jax.experimental.pallas import tpu as pltpu

_LANE = 128
_BF16_SUBLANE = 16  # bf16 packs 2 rows/sublane -> pad batch to 16


def _round_up(x, m):
    return (x + m - 1) // m * m


def _vmem_capacity_bytes():
    try:
        info = pltpu.get_tpu_info()
        cap = getattr(info, "vmem_capacity_bytes", None)
        if cap:
            return int(cap)
    except Exception:
        pass
    return 64 * 1024 * 1024  # conservative (v7x physical)


def _vmem_limit(need_bytes):
    """Per-generation VMEM cap with headroom for Mosaic internal scratch."""
    ceiling = _vmem_capacity_bytes() * 13 // 16  # ~52 MiB v7x, ~104 MiB v5e/v6e
    return int(min(max(2 * need_bytes, 32 * 1024 * 1024), ceiling))


# --------------------------------------------------------------------------- #
# Kernels
# --------------------------------------------------------------------------- #
def _hidden_kernel(x_ref, w1_ref, h_ref, acc_ref):
    # hidden = X @ W1, accumulated in f32 over K (= vocab) tiles.
    @pl.when(pl.program_id(0) == 0)
    def _():
        acc_ref[...] = jnp.zeros_like(acc_ref)

    acc_ref[...] += jnp.dot(
        x_ref[...], w1_ref[...], preferred_element_type=jnp.float32
    )

    @pl.when(pl.program_id(0) == pl.num_programs(0) - 1)
    def _():
        h_ref[...] = acc_ref[...].astype(h_ref.dtype)


def _output_kernel(h_ref, w2_ref, out_ref):
    # out[:, tile j] = hidden @ W2[:, tile j]   (f32 accumulation on the MXU)
    out_ref[...] = jnp.dot(
        h_ref[...], w2_ref[...], preferred_element_type=jnp.float32
    ).astype(out_ref.dtype)


# --------------------------------------------------------------------------- #
# Weight preparation (one-time, NOT per forward call)
# --------------------------------------------------------------------------- #
def _choose_vocab_tile(V):
    v128 = _round_up(V, _LANE)
    return v128 if v128 <= 2048 else 1024   # single step when W2 is small


def _choose_k_tile(V):
    v128 = _round_up(V, _LANE)
    return v128 if v128 <= 4096 else 2048


def prepare_weights(w_weight, wt_weight, *, weight_dtype=jnp.bfloat16):
    """Transpose + zero-pad + cast weights once.

    w_weight : [E, V]  (PyTorch nn.Linear(voc_size, embedding_size).weight)
    wt_weight: [V, E]  (PyTorch nn.Linear(embedding_size, voc_size).weight)

    Returns
      w1_p [V_kpad, E_pad]  (E_pad multiple of 128, V_kpad multiple of K tile)
      w2_p [E_pad,  V_pad]  (V_pad multiple of vocab tile -> unmasked stores)
    """
    E, V = w_weight.shape
    assert wt_weight.shape == (V, E)
    e_pad = _round_up(E, _LANE)
    tk = _choose_k_tile(V)
    v_kpad = _round_up(V, tk)
    tn = _choose_vocab_tile(V)
    v_pad = _round_up(V, tn)
    w1_p = jnp.pad(w_weight.T, ((0, v_kpad - V), (0, e_pad - E))).astype(weight_dtype)
    w2_p = jnp.pad(wt_weight.T, ((0, e_pad - E), (0, v_pad - V))).astype(weight_dtype)
    return w1_p, w2_p


# --------------------------------------------------------------------------- #
# Forward
# --------------------------------------------------------------------------- #
def word2vec_forward(x, w1_p, w2_p):
    """x: [B, V] dense input.  w1_p/w2_p: outputs of prepare_weights()."""
    B, V = x.shape
    v_kpad, e_pad = w1_p.shape
    e_pad2, v_pad = w2_p.shape
    assert e_pad2 == e_pad and v_kpad >= V and v_pad >= V

    out_dtype = x.dtype
    wdt = w1_p.dtype
    wbytes = jnp.dtype(wdt).itemsize

    b_pad = _round_up(max(B, _BF16_SUBLANE), _BF16_SUBLANE)
    xp = x.astype(wdt)
    if b_pad != B or v_kpad != V:
        xp = jnp.pad(xp, ((0, b_pad - B), (0, v_kpad - V)))

    # ---------------- stage 1: hidden = X @ W1 (K-tiled over vocab) ----------
    tk = v_kpad if v_kpad <= 4096 else 2048
    assert v_kpad % tk == 0
    nk = v_kpad // tk
    h_need = (
        2 * b_pad * tk * wbytes      # X tiles (double-buffered)
        + 2 * tk * e_pad * wbytes    # W1 tiles (double-buffered)
        + 2 * b_pad * e_pad * wbytes # hidden output
        + b_pad * e_pad * 4          # f32 accumulator scratch
    )
    hidden = pl.pallas_call(
        _hidden_kernel,
        out_shape=jax.ShapeDtypeStruct((b_pad, e_pad), wdt),
        grid_spec=pltpu.PrefetchScalarGridSpec(
            num_scalar_prefetch=0,
            grid=(nk,),
            in_specs=[
                pl.BlockSpec((b_pad, tk), lambda k: (0, k)),   # X row-slab, K tile
                pl.BlockSpec((tk, e_pad), lambda k: (k, 0)),   # W1 K tile
            ],
            out_specs=pl.BlockSpec((b_pad, e_pad), lambda k: (0, 0)),
            scratch_shapes=[pltpu.VMEM((b_pad, e_pad), jnp.float32)],
        ),
        compiler_params=pltpu.CompilerParams(
            dimension_semantics=("arbitrary",),    # K is a reduction axis
            vmem_limit_bytes=_vmem_limit(h_need),
        ),
        cost_estimate=pl.CostEstimate(
            flops=2 * b_pad * v_kpad * e_pad,
            transcendentals=0,
            bytes_accessed=wbytes * (b_pad * v_kpad + v_kpad * e_pad + b_pad * e_pad),
        ),
    )(xp, w1_p)

    # ---------------- stage 2: out = hidden @ W2 (vocab-column tiled) --------
    tn = v_pad if v_pad <= 2048 else 1024
    assert v_pad % tn == 0
    nt = v_pad // tn
    o_need = (
        2 * b_pad * e_pad * wbytes   # hidden (constant index map, double-buffered)
        + 2 * e_pad * tn * wbytes    # W2 column tiles (double-buffered)
        + 2 * b_pad * tn * 4         # output tiles (f32)
    )
    # NOTE: if W2 DMA is still exposed at tiny B, the W2 BlockSpec can take
    # pipeline_mode=pl.Buffered(3) for deeper buffering (cheap: one extra tile).
    out = pl.pallas_call(
        _output_kernel,
        out_shape=jax.ShapeDtypeStruct((b_pad, v_pad), out_dtype),
        grid_spec=pltpu.PrefetchScalarGridSpec(
            num_scalar_prefetch=0,
            grid=(nt,),
            in_specs=[
                pl.BlockSpec((b_pad, e_pad), lambda j: (0, 0)),  # hidden (resident)
                pl.BlockSpec((e_pad, tn), lambda j: (0, j)),     # W2 column tile
            ],
            out_specs=pl.BlockSpec((b_pad, tn), lambda j: (0, j)),
        ),
        compiler_params=pltpu.CompilerParams(
            # Tiles are independent (hidden precomputed), so the vocab axis can
            # shard across both TensorCores on v7x; no-op on v5e/v6e.
            dimension_semantics=("parallel",),
            vmem_limit_bytes=_vmem_limit(o_need),
        ),
        cost_estimate=pl.CostEstimate(
            flops=2 * b_pad * e_pad * v_pad,
            transcendentals=0,
            bytes_accessed=wbytes * (b_pad * e_pad + e_pad * v_pad)
            + 4 * b_pad * v_pad,
        ),
    )(hidden, w2_p)

    return out[:B, :V]


# --------------------------------------------------------------------------- #
# Demo / correctness check
# --------------------------------------------------------------------------- #
if __name__ == "__main__":
    batch = 8
    voc_size = 512
    embedding_size = 64

    key = jax.random.PRNGKey(0)
    kx, kw, kwt = jax.random.split(key, 3)

    # PyTorch nn.Linear weight layout: [out_features, in_features].
    w_weight = jax.random.normal(kw, (embedding_size, voc_size), jnp.float32) * 0.02
    wt_weight = jax.random.normal(kwt, (voc_size, embedding_size), jnp.float32) * 0.02

    # Dense input (one-hot rows are just the typical special case).
    x = jax.random.normal(kx, (batch, voc_size), jnp.float32)

    # One-time weight prep (transpose + pad + bf16 cast) -- outside the hot path.
    w1_p, w2_p = prepare_weights(w_weight, wt_weight)

    out = word2vec_forward(x, w1_p, w2_p)
    out = jax.block_until_ready(out)

    # Reference in plain JAX f32 (matches the PyTorch module's math); loose
    # tolerance accounts for the one-time bf16 weight/input quantization.
    ref = (x @ w_weight.T) @ wt_weight.T
    assert out.shape == (batch, voc_size)
    assert jnp.allclose(out, ref, atol=1e-2, rtol=5e-2), float(
        jnp.max(jnp.abs(out - ref))
    )

    print("KERNEL_OK")
</pallas_src>

<mosaic_0001>
module attributes {stable_mosaic.version = 11 : i64} {
  func.func @_hidden_kernel(%arg0: i32, %arg1: memref<16x512xbf16, #tpu.memory_space<vmem>>, %arg2: memref<512x128xbf16, #tpu.memory_space<vmem>>, %arg3: memref<16x128xbf16, #tpu.memory_space<vmem>>, %arg4: memref<16x128xf32, #tpu.memory_space<vmem>>) attributes {dimension_semantics = [#tpu.dimension_semantics<arbitrary>], iteration_bounds = array<i64: 1>, scalar_prefetch = 0 : i64, scratch_operands = 1 : i64, tpu.core_type = #tpu.core_type<tc>, window_params = [{transform_indices = @transform_0, window_bounds = array<i64: 16, 512>}, {transform_indices = @transform_1, window_bounds = array<i64: 512, 128>}, {pipeline_mode = #tpu.pipeline_mode<synchronous>, transform_indices = @transform_2, window_bounds = array<i64: 16, 128>}]} {
    %c0_i32 = arith.constant 0 : i32
    %0 = arith.cmpi eq, %arg0, %c0_i32 : i32
    %1 = arith.extui %0 : i1 to i32
    %c0_i32_0 = arith.constant 0 : i32
    %2 = arith.cmpi ne, %1, %c0_i32_0 : i32
    scf.if %2 {
      %cst_10 = arith.constant 0.000000e+00 : f32
      %12 = vector.broadcast %cst_10 : f32 to vector<16x128xf32>
      %c0_11 = arith.constant 0 : index
      %c0_12 = arith.constant 0 : index
      %13 = vector.load %arg4[%c0_11, %c0_12] : memref<16x128xf32, #tpu.memory_space<vmem>>, vector<16x128xf32>
      tpu.vector_store %arg4[%c0_11, %c0_12], %12 {strides = array<i32>} : memref<16x128xf32, #tpu.memory_space<vmem>>, vector<16x128xf32>,
    } else {
    }
    %c0 = arith.constant 0 : index
    %c0_1 = arith.constant 0 : index
    %3 = vector.load %arg4[%c0, %c0_1] : memref<16x128xf32, #tpu.memory_space<vmem>>, vector<16x128xf32>
    %c0_2 = arith.constant 0 : index
    %c0_3 = arith.constant 0 : index
    %4 = vector.load %arg1[%c0_2, %c0_3] : memref<16x512xbf16, #tpu.memory_space<vmem>>, vector<16x512xbf16>
    %c0_4 = arith.constant 0 : index
    %c0_5 = arith.constant 0 : index
    %5 = vector.load %arg2[%c0_4, %c0_5] : memref<512x128xbf16, #tpu.memory_space<vmem>>, vector<512x128xbf16>
    %cst = arith.constant dense<0.000000e+00> : vector<16x128xf32>
    %6 = tpu.matmul %4, %5, %cst {dimension_numbers = #tpu.dot_dimension_numbers<[1], [0], [0], [1], [0, 0, 1, 1], [], []>} : vector<16x512xbf16>, vector<512x128xbf16>, vector<16x128xf32> -> vector<16x128xf32>
    %7 = arith.addf %3, %6 : vector<16x128xf32>
    %c0_6 = arith.constant 0 : index
    %c0_7 = arith.constant 0 : index
    %8 = vector.load %arg4[%c0_6, %c0_7] : memref<16x128xf32, #tpu.memory_space<vmem>>, vector<16x128xf32>
    tpu.vector_store %arg4[%c0_6, %c0_7], %7 {strides = array<i32>} : memref<16x128xf32, #tpu.memory_space<vmem>>, vector<16x128xf32>,
    %c0_i32_8 = arith.constant 0 : i32
    %9 = arith.cmpi eq, %arg0, %c0_i32_8 : i32
    %10 = arith.extui %9 : i1 to i32
    %c0_i32_9 = arith.constant 0 : i32
    %11 = arith.cmpi ne, %10, %c0_i32_9 : i32
    scf.if %11 {
      %c0_10 = arith.constant 0 : index
      %c0_11 = arith.constant 0 : index
      %12 = vector.load %arg4[%c0_10, %c0_11] : memref<16x128xf32, #tpu.memory_space<vmem>>, vector<16x128xf32>
      %13 = arith.truncf %12 : vector<16x128xf32> to vector<16x128xbf16>
      %c0_12 = arith.constant 0 : index
      %c0_13 = arith.constant 0 : index
      %14 = vector.load %arg3[%c0_12, %c0_13] : memref<16x128xbf16, #tpu.memory_space<vmem>>, vector<16x128xbf16>
      tpu.vector_store %arg3[%c0_12, %c0_13], %13 {strides = array<i32>} : memref<16x128xbf16, #tpu.memory_space<vmem>>, vector<16x128xbf16>,
    } else {
    }
    return
  }
  func.func @transform_0(%arg0: i32) -> (i32, i32) {
    %c0_i32 = arith.constant 0 : i32
    %c0_i32_0 = arith.constant 0 : i32
    return %c0_i32, %arg0 : i32, i32
  }
  func.func @transform_1(%arg0: i32) -> (i32, i32) {
    %c0_i32 = arith.constant 0 : i32
    %c0_i32_0 = arith.constant 0 : i32
    return %arg0, %c0_i32 : i32, i32
  }
  func.func @transform_2(%arg0: i32) -> (i32, i32) {
    %c0_i32 = arith.constant 0 : i32
    %c0_i32_0 = arith.constant 0 : i32
    %c0_i32_1 = arith.constant 0 : i32
    return %c0_i32, %c0_i32_0 : i32, i32
  }
}

</mosaic_0001>

<llo_original>
// kernel: tpu_custom_call.1
$region0: #{tpu_custom_call.1}
  #allocation0 [shape = 'u32[]', space=smem, size = 0x4, offset = 0x4, fixed_abs, tag = 'smem constant byte address 0x4 - core index']
  #allocation1 [shape = 'u32[144,128]{1,0:T(1,128)}', space=vmem, size = 0x12000, scoped, tag = 'internal scratch']
  #allocation2 [shape = 'f32[16,128]{1,0:T(8,128)}', space=vmem, size = 0x2000, scoped, tag = 'scratch operand']
  %s0 = inlined_call_operand.hbm [shape: bf16[16,512], index: 0, kind: input, shape index: {}]
  %s1 = inlined_call_operand.hbm [shape: bf16[512,128], index: 1, kind: input, shape index: {}]
  %s2 = inlined_call_operand.hbm [shape: bf16[16,128], index: 2, kind: output, shape index: {}]
  %s3 = sld [smem:[#allocation0]]
  $region34: #{tpu_custom_call.1} parent=0
    _
  %s5 = ssub.s32 1, %s3
  %s6 = scalar_select 0, %s5, %s3
  $region1: #{tpu_custom_call.1} parent=0
    #allocation3 [shape = 'u8[16384]{0}', space=vmem, size = 0x4000, scoped, tag = 'input window, operand 0, single buffered']
    #allocation4 [shape = 's32[1]{0}', space=sflag, size = 0x4, scoped, tag = 'scoped memory for tpu_custom_call.1']
    #allocation5 [shape = 's32[1]{0}', space=sflag, size = 0x4, scoped, tag = 'scoped memory for tpu_custom_call.1']
    #allocation6 [shape = 'u8[131072]{0}', space=vmem, size = 0x20000, scoped, tag = 'input window, operand 1, single buffered']
    #allocation7 [shape = 's32[1]{0}', space=sflag, size = 0x4, scoped, tag = 'scoped memory for tpu_custom_call.1']
    #allocation8 [shape = 'u8[4096]{0}', space=vmem, size = 0x1000, scoped, tag = 'output window, operand 0, single buffered']
    %7 = vsyncpa [#allocation4], 0
    %8 = vsyncpa [#allocation7], 0
    %9 = vsyncpa [#allocation5], 0
    // Predicated region
    $region2: #{tpu_custom_call.1} parent=1 // pred_check
      _
    $region3: #{tpu_custom_call.1} parent=1 // pred_check_branch
      %11 = sbr.rel (0) target = $region5
    $region4: #{tpu_custom_call.1} parent=1 // pred_region
      %s13 = ssub.s32 512, 512
      %14 = vsyncadd [#allocation4], %s13
      %s15 = sshll.u32 [#allocation3], 4
      %s16 = int_to_ptr.vmem [resolvable:$true] %s15
      %21 = dma.hbm_to_vmem [thread:$0]  %s0, 512, %s16, [#allocation4], 256, 256, 16
    $region5: #{tpu_custom_call.1} parent=1 // pred_fallthru
      _
    // Predicated region
    $region6: #{tpu_custom_call.1} parent=1 // pred_check
      _
    $region7: #{tpu_custom_call.1} parent=1 // pred_check_branch
      %23 = sbr.rel (0) target = $region9
    $region8: #{tpu_custom_call.1} parent=1 // pred_region
      %s25 = ssub.s32 4096, 4096
      %26 = vsyncadd [#allocation7], %s25
      %s27 = sshll.u32 [#allocation6], 4
      %s28 = int_to_ptr.vmem [resolvable:$true] %s27
      %33 = dma.hbm_to_vmem [thread:$0]  %s1, 4096, %s28, [#allocation7], 64, 64, 4
    $region9: #{tpu_custom_call.1} parent=1 // pred_fallthru
      _
    // Predicated region
    $region10: #{tpu_custom_call.1} parent=1 // pred_check
      _
    $region11: #{tpu_custom_call.1} parent=1 // pred_check_branch
      %35 = sbr.rel (0) target = $region13
    $region12: #{tpu_custom_call.1} parent=1 // pred_region
      %36 = dma.done [#allocation4], 512
    $region13: #{tpu_custom_call.1} parent=1 // pred_fallthru
      _
    // Predicated region
    $region14: #{tpu_custom_call.1} parent=1 // pred_check
      _
    $region15: #{tpu_custom_call.1} parent=1 // pred_check_branch
      %38 = sbr.rel (0) target = $region17
    $region16: #{tpu_custom_call.1} parent=1 // pred_region
      %39 = dma.done [#allocation7], 4096
    $region17: #{tpu_custom_call.1} parent=1 // pred_fallthru
      _
    %p41 = scmp.eq.s32.totalorder 0, 0
    // Predicated region
    $region18: #{tpu_custom_call.1} parent=1 // pred_check
      %p42 = pneg %p41
    $region19: #{tpu_custom_call.1} parent=1 // pred_check_branch
      %44 = sbr.rel (%p42) target = $region21
    $region20: #{tpu_custom_call.1} parent=1 // pred_region
      %45 = vst [vmem:[#allocation2] sm:$0xff] 0.0
      %46 = vst [vmem:[#allocation2 + $0x8] sm:$0xff] 0.0
    $region21: #{tpu_custom_call.1} parent=1 // pred_fallthru
      _
    %v47 = vld [vmem:[#allocation2] sm:$0xff]
    %v48 = vld [vmem:[#allocation2 + $0x8] sm:$0xff]
    %v49 = vld [vmem:[#allocation3] sm:$0xff]
    %v50 = vld [vmem:[#allocation3 + $0x8] sm:$0xff]
    %v51 = vld [vmem:[#allocation3 + $0x10] sm:$0xff]
    %v52 = vld [vmem:[#allocation3 + $0x18] sm:$0xff]
    %v53 = vld [vmem:[#allocation6] sm:$0xf]
    %v54 = vld [vmem:[#allocation6 + $0x4] sm:$0xf]
    %v55 = vld [vmem:[#allocation6 + $0x8] sm:$0xf]
    %v56 = vld [vmem:[#allocation6 + $0xc] sm:$0xf]
    %v57 = vld [vmem:[#allocation6 + $0x10] sm:$0xf]
    %v58 = vld [vmem:[#allocation6 + $0x14] sm:$0xf]
    %v59 = vld [vmem:[#allocation6 + $0x18] sm:$0xf]
    %v60 = vld [vmem:[#allocation6 + $0x1c] sm:$0xf]
    %v61 = vld [vmem:[#allocation6 + $0x20] sm:$0xf]
    %v62 = vld [vmem:[#allocation6 + $0x24] sm:$0xf]
    %v63 = vld [vmem:[#allocation6 + $0x28] sm:$0xf]
    %v64 = vld [vmem:[#allocation6 + $0x2c] sm:$0xf]
    %v65 = vld [vmem:[#allocation6 + $0x30] sm:$0xf]
    %v66 = vld [vmem:[#allocation6 + $0x34] sm:$0xf]
    %v67 = vld [vmem:[#allocation6 + $0x38] sm:$0xf]
    %v68 = vld [vmem:[#allocation6 + $0x3c] sm:$0xf]
    %v69 = vld [vmem:[#allocation6 + $0x40] sm:$0xf]
    %v70 = vld [vmem:[#allocation6 + $0x44] sm:$0xf]
    %v71 = vld [vmem:[#allocation6 + $0x48] sm:$0xf]
    %v72 = vld [vmem:[#allocation6 + $0x4c] sm:$0xf]
    %v73 = vld [vmem:[#allocation6 + $0x50] sm:$0xf]
    %v74 = vld [vmem:[#allocation6 + $0x54] sm:$0xf]
    %v75 = vld [vmem:[#allocation6 + $0x58] sm:$0xf]
    %v76 = vld [vmem:[#allocation6 + $0x5c] sm:$0xf]
    %v77 = vld [vmem:[#allocation6 + $0x60] sm:$0xf]
    %v78 = vld [vmem:[#allocation6 + $0x64] sm:$0xf]
    %v79 = vld [vmem:[#allocation6 + $0x68] sm:$0xf]
    %v80 = vld [vmem:[#allocation6 + $0x6c] sm:$0xf]
    %v81 = vld [vmem:[#allocation6 + $0x70] sm:$0xf]
    %v82 = vld [vmem:[#allocation6 + $0x74] sm:$0xf]
    %v83 = vld [vmem:[#allocation6 + $0x78] sm:$0xf]
    %v84 = vld [vmem:[#allocation6 + $0x7c] sm:$0xf]
    %v85 = vld [vmem:[#allocation6 + $0x80] sm:$0xf]
    %v86 = vld [vmem:[#allocation6 + $0x84] sm:$0xf]
    %v87 = vld [vmem:[#allocation6 + $0x88] sm:$0xf]
    %v88 = vld [vmem:[#allocation6 + $0x8c] sm:$0xf]
    %v89 = vld [vmem:[#allocation6 + $0x90] sm:$0xf]
    %v90 = vld [vmem:[#allocation6 + $0x94] sm:$0xf]
    %v91 = vld [vmem:[#allocation6 + $0x98] sm:$0xf]
    %v92 = vld [vmem:[#allocation6 + $0x9c] sm:$0xf]
    %v93 = vld [vmem:[#allocation6 + $0xa0] sm:$0xf]
    %v94 = vld [vmem:[#allocation6 + $0xa4] sm:$0xf]
    %v95 = vld [vmem:[#allocation6 + $0xa8] sm:$0xf]
    %v96 = vld [vmem:[#allocation6 + $0xac] sm:$0xf]
    %v97 = vld [vmem:[#allocation6 + $0xb0] sm:$0xf]
    %v98 = vld [vmem:[#allocation6 + $0xb4] sm:$0xf]
    %v99 = vld [vmem:[#allocation6 + $0xb8] sm:$0xf]
    %v100 = vld [vmem:[#allocation6 + $0xbc] sm:$0xf]
    %v101 = vld [vmem:[#allocation6 + $0xc0] sm:$0xf]
    %v102 = vld [vmem:[#allocation6 + $0xc4] sm:$0xf]
    %v103 = vld [vmem:[#allocation6 + $0xc8] sm:$0xf]
    %v104 = vld [vmem:[#allocation6 + $0xcc] sm:$0xf]
    %v105 = vld [vmem:[#allocation6 + $0xd0] sm:$0xf]
    %v106 = vld [vmem:[#allocation6 + $0xd4] sm:$0xf]
    %v107 = vld [vmem:[#allocation6 + $0xd8] sm:$0xf]
    %v108 = vld [vmem:[#allocation6 + $0xdc] sm:$0xf]
    %v109 = vld [vmem:[#allocation6 + $0xe0] sm:$0xf]
    %v110 = vld [vmem:[#allocation6 + $0xe4] sm:$0xf]
    %v111 = vld [vmem:[#allocation6 + $0xe8] sm:$0xf]
    %v112 = vld [vmem:[#allocation6 + $0xec] sm:$0xf]
    %v113 = vld [vmem:[#allocation6 + $0xf0] sm:$0xf]
    %v114 = vld [vmem:[#allocation6 + $0xf4] sm:$0xf]
    %v115 = vld [vmem:[#allocation6 + $0xf8] sm:$0xf]
    %v116 = vld [vmem:[#allocation6 + $0xfc] sm:$0xf]
    %v121 = vunpack.c.l.b16 %v49
    %v122 = vunpack.c.h.b16 %v49
    %v123 = vunpack.c.l.b16 %v50
    %v124 = vunpack.c.h.b16 %v50
    %v125 = vunpack.c.l.b16 %v51
    %v126 = vunpack.c.h.b16 %v51
    %v127 = vunpack.c.l.b16 %v52
    %v128 = vunpack.c.h.b16 %v52
    %v129 = vpack.c.b16 %v125, %v121
    %v130 = vpack.c.b16 %v126, %v122
    %v131 = vpack.c.b16 %v127, %v123
    %v132 = vpack.c.b16 %v128, %v124
    %v201 = vunpack.c.l.b16 %v53
    %v202 = vunpack.c.l.b16 %v54
    %v203 = vunpack.c.l.b16 %v55
    %v204 = vunpack.c.l.b16 %v56
    %v205 = vunpack.c.l.b16 %v57
    %v206 = vunpack.c.l.b16 %v58
    %v207 = vunpack.c.l.b16 %v59
    %v208 = vunpack.c.l.b16 %v60
    %v209 = vunpack.c.l.b16 %v61
    %v210 = vunpack.c.l.b16 %v62
    %v211 = vunpack.c.l.b16 %v63
    %v212 = vunpack.c.l.b16 %v64
    %v213 = vunpack.c.l.b16 %v65
    %v214 = vunpack.c.l.b16 %v66
    %v215 = vunpack.c.l.b16 %v67
    %v216 = vunpack.c.l.b16 %v68
    %v217 = vunpack.c.l.b16 %v69
    %v218 = vunpack.c.l.b16 %v70
    %v219 = vunpack.c.l.b16 %v71
    %v220 = vunpack.c.l.b16 %v72
    %v221 = vunpack.c.l.b16 %v73
    %v222 = vunpack.c.l.b16 %v74
    %v223 = vunpack.c.l.b16 %v75
    %v224 = vunpack.c.l.b16 %v76
    %v225 = vunpack.c.l.b16 %v77
    %v226 = vunpack.c.l.b16 %v78
    %v227 = vunpack.c.l.b16 %v79
    %v228 = vunpack.c.l.b16 %v80
    %v229 = vunpack.c.l.b16 %v81
    %v230 = vunpack.c.l.b16 %v82
    %v231 = vunpack.c.l.b16 %v83
    %v232 = vunpack.c.l.b16 %v84
    %v233 = vunpack.c.l.b16 %v85
    %v234 = vunpack.c.l.b16 %v86
    %v235 = vunpack.c.l.b16 %v87
    %v236 = vunpack.c.l.b16 %v88
    %v237 = vunpack.c.l.b16 %v89
    %v238 = vunpack.c.l.b16 %v90
    %v239 = vunpack.c.l.b16 %v91
    %v240 = vunpack.c.l.b16 %v92
    %v241 = vunpack.c.l.b16 %v93
    %v242 = vunpack.c.l.b16 %v94
    %v243 = vunpack.c.l.b16 %v95
    %v244 = vunpack.c.l.b16 %v96
    %v245 = vunpack.c.l.b16 %v97
    %v246 = vunpack.c.l.b16 %v98
    %v247 = vunpack.c.l.b16 %v99
    %v248 = vunpack.c.l.b16 %v100
    %v249 = vunpack.c.l.b16 %v101
    %v250 = vunpack.c.l.b16 %v102
    %v251 = vunpack.c.l.b16 %v103
    %v252 = vunpack.c.l.b16 %v104
    %v253 = vunpack.c.l.b16 %v105
    %v254 = vunpack.c.l.b16 %v106
    %v255 = vunpack.c.l.b16 %v107
    %v256 = vunpack.c.l.b16 %v108
    %v257 = vunpack.c.l.b16 %v109
    %v258 = vunpack.c.l.b16 %v110
    %v259 = vunpack.c.l.b16 %v111
    %v260 = vunpack.c.l.b16 %v112
    %v261 = vunpack.c.l.b16 %v113
    %v262 = vunpack.c.l.b16 %v114
    %v263 = vunpack.c.l.b16 %v115
    %v264 = vunpack.c.l.b16 %v116
    %v265 = vpack.c.b16 %v202, %v201
    %v266 = vpack.c.b16 %v204, %v203
    %v267 = vpack.c.b16 %v206, %v205
    %v268 = vpack.c.b16 %v208, %v207
    %v269 = vpack.c.b16 %v210, %v209
    %v270 = vpack.c.b16 %v212, %v211
    %v271 = vpack.c.b16 %v214, %v213
    %v272 = vpack.c.b16 %v216, %v215
    %v273 = vpack.c.b16 %v218, %v217
    %v274 = vpack.c.b16 %v220, %v219
    %v275 = vpack.c.b16 %v222, %v221
    %v276 = vpack.c.b16 %v224, %v223
    %v277 = vpack.c.b16 %v226, %v225
    %v278 = vpack.c.b16 %v228, %v227
    %v279 = vpack.c.b16 %v230, %v229
    %v280 = vpack.c.b16 %v232, %v231
    %v281 = vpack.c.b16 %v234, %v233
    %v282 = vpack.c.b16 %v236, %v235
    %v283 = vpack.c.b16 %v238, %v237
    %v284 = vpack.c.b16 %v240, %v239
    %v285 = vpack.c.b16 %v242, %v241
    %v286 = vpack.c.b16 %v244, %v243
    %v287 = vpack.c.b16 %v246, %v245
    %v288 = vpack.c.b16 %v248, %v247
    %v289 = vpack.c.b16 %v250, %v249
    %v290 = vpack.c.b16 %v252, %v251
    %v291 = vpack.c.b16 %v254, %v253
    %v292 = vpack.c.b16 %v256, %v255
    %v293 = vpack.c.b16 %v258, %v257
    %v294 = vpack.c.b16 %v260, %v259
    %v295 = vpack.c.b16 %v262, %v261
    %v296 = vpack.c.b16 %v264, %v263
    %329 = vmatprep.subr.bf16.mxu0 0
    %330 = vmatpush1.bf16.msra.mxu0 %v265
    %331 = vmatprep.subr.bf16.mxu0 0
    %332 = vmatpush1.bf16.msra.mxu0 %v266
    %333 = vmatprep.subr.bf16.mxu0 0
    %334 = vmatpush1.bf16.msra.mxu0 %v267
    %335 = vmatprep.subr.bf16.mxu0 0
    %336 = vmatpush1.bf16.msra.mxu0 %v268
    %337 = vmatprep.subr.bf16.mxu0 0
    %338 = vmatpush1.bf16.msra.mxu0 %v269
    %339 = vmatprep.subr.bf16.mxu0 0
    %340 = vmatpush1.bf16.msra.mxu0 %v270
    %341 = vmatprep.subr.bf16.mxu0 0
    %342 = vmatpush1.bf16.msra.mxu0 %v271
    %343 = vmatprep.subr.bf16.mxu0 0
    %344 = vmatpush1.bf16.msra.mxu0 %v272
    %345 = vmatprep.subr.bf16.mxu0 0
    %346 = vmatpush1.bf16.msra.mxu0 %v273
    %347 = vmatprep.subr.bf16.mxu0 0
    %348 = vmatpush1.bf16.msra.mxu0 %v274
    %349 = vmatprep.subr.bf16.mxu0 0
    %350 = vmatpush1.bf16.msra.mxu0 %v275
    %351 = vmatprep.subr.bf16.mxu0 0
    %352 = vmatpush1.bf16.msra.mxu0 %v276
    %353 = vmatprep.subr.bf16.mxu0 0
    %354 = vmatpush1.bf16.msra.mxu0 %v277
    %355 = vmatprep.subr.bf16.mxu0 0
    %356 = vmatpush1.bf16.msra.mxu0 %v278
    %357 = vmatprep.subr.bf16.mxu0 0
    %358 = vmatpush1.bf16.msra.mxu0 %v279
    %359 = vmatprep.subr.bf16.mxu0 0
    %360 = vmatpush1.bf16.msra.mxu0 %v280
    %361 = vmatprep.mubr.bf16.mxu0 %v130
    %362 = vmatmul.mubr.bf16.gmra.mrb[0].mxu0 %v129
    %v363 = vpop.f32.mrb[0].mxu0
    %v364 = vadd.f32 0.0, %v363
    %v365 = vpop.f32.mrb[0].mxu0
    %v366 = vpop.f32.mrb[0].mxu0
    %v367 = vadd.f32 0.0, %v366
    %v368 = vpop.f32.mrb[0].mxu0
    %369 = vdwg.mxu0
    %370 = vmatprep.subr.bf16.mxu0 0
    %371 = vmatpush1.bf16.msra.mxu0 %v281
    %372 = vmatprep.subr.bf16.mxu0 0
    %373 = vmatpush1.bf16.msra.mxu0 %v282
    %374 = vmatprep.subr.bf16.mxu0 0
    %375 = vmatpush1.bf16.msra.mxu0 %v283
    %376 = vmatprep.subr.bf16.mxu0 0
    %377 = vmatpush1.bf16.msra.mxu0 %v284
    %378 = vmatprep.subr.bf16.mxu0 0
    %379 = vmatpush1.bf16.msra.mxu0 %v285
    %380 = vmatprep.subr.bf16.mxu0 0
    %381 = vmatpush1.bf16.msra.mxu0 %v286
    %382 = vmatprep.subr.bf16.mxu0 0
    %383 = vmatpush1.bf16.msra.mxu0 %v287
    %384 = vmatprep.subr.bf16.mxu0 0
    %385 = vmatpush1.bf16.msra.mxu0 %v288
    %386 = vmatprep.subr.bf16.mxu0 0
    %387 = vmatpush1.bf16.msra.mxu0 %v289
    %388 = vmatprep.subr.bf16.mxu0 0
    %389 = vmatpush1.bf16.msra.mxu0 %v290
    %390 = vmatprep.subr.bf16.mxu0 0
    %391 = vmatpush1.bf16.msra.mxu0 %v291
    %392 = vmatprep.subr.bf16.mxu0 0
    %393 = vmatpush1.bf16.msra.mxu0 %v292
    %394 = vmatprep.subr.bf16.mxu0 0
    %395 = vmatpush1.bf16.msra.mxu0 %v293
    %396 = vmatprep.subr.bf16.mxu0 0
    %397 = vmatpush1.bf16.msra.mxu0 %v294
    %398 = vmatprep.subr.bf16.mxu0 0
    %399 = vmatpush1.bf16.msra.mxu0 %v295
    %400 = vmatprep.subr.bf16.mxu0 0
    %401 = vmatpush1.bf16.msra.mxu0 %v296
    %402 = vmatprep.mubr.bf16.mxu0 %v132
    %403 = vmatmul.mubr.bf16.gmra.mrb[0].mxu0 %v131
    %v404 = vpop.f32.mrb[0].mxu0
    %v405 = vadd.f32 %v364, %v404
    %v406 = vpop.f32.mrb[0].mxu0
    %v407 = vpop.f32.mrb[0].mxu0
    %v408 = vadd.f32 %v367, %v407
    %v409 = vpop.f32.mrb[0].mxu0
    %410 = vdwg.mxu0
    %v411 = vadd.f32 %v47, %v405
    %v412 = vadd.f32 %v48, %v408
    %413 = vst [vmem:[#allocation2] sm:$0xff] %v411
    %414 = vst [vmem:[#allocation2 + $0x8] sm:$0xff] %v412
    // Predicated region
    $region22: #{tpu_custom_call.1} parent=1 // pred_check
      %p415 = pneg %p41
    $region23: #{tpu_custom_call.1} parent=1 // pred_check_branch
      %417 = sbr.rel (%p415) target = $region25
    $region24: #{tpu_custom_call.1} parent=1 // pred_region
      %v418 = vld [vmem:[#allocation2] sm:$0xff]
      %v419 = vld [vmem:[#allocation2 + $0x8] sm:$0xff]
      %v420 = vpack.c.bf16 %v419, %v418
      %v422 = vunpack.c.l.b16 %v420
      %v423 = vunpack.c.h.b16 %v420
      %v424 = vpack.c.b16 %v422, %v422
      %v425 = vpack.c.b16 %v423, %v423
      %428 = vst [vmem:[#allocation8] sm:$0xf] %v424
      %429 = vst [vmem:[#allocation8 + $0x4] sm:$0xf] %v425
    $region25: #{tpu_custom_call.1} parent=1 // pred_fallthru
      _
    // Predicated region
    $region26: #{tpu_custom_call.1} parent=1 // pred_check
      _
    $region27: #{tpu_custom_call.1} parent=1 // pred_check_branch
      %431 = sbr.rel (0) target = $region29
    $region28: #{tpu_custom_call.1} parent=1 // pred_region
      %s433 = ssub.s32 128, 128
      %434 = vsyncadd [#allocation5], %s433
      %s435 = sshll.u32 [#allocation8], 4
      %s436 = int_to_ptr.vmem [resolvable:$true] %s435
      %441 = dma.vmem_to_hbm [thread:$0]  %s436, 128, %s2, [#allocation5], 64, 64, 4
    $region29: #{tpu_custom_call.1} parent=1 // pred_fallthru
      _
    // Predicated region
    $region30: #{tpu_custom_call.1} parent=1 // pred_check
      _
    $region31: #{tpu_custom_call.1} parent=1 // pred_check_branch
      %443 = sbr.rel (0) target = $region33
    $region32: #{tpu_custom_call.1} parent=1 // pred_region
      %444 = dma.done [#allocation5], 128
    $region33: #{tpu_custom_call.1} parent=1 // pred_fallthru
      _
    %445 = vsyncpa [#allocation4], 1
    %446 = vsyncpa [#allocation7], 1
    %447 = vsyncpa [#allocation5], 1

</llo_original>
